<compile_context>
chip_gen: v7x
topology: tpu7x:2x2x1
jax: 0.10.0
libtpu: 0.0.40
codegen_flags: <defaults>
</compile_context>

<pallas_src>
import jax
import jax.numpy as jnp
from jax.experimental import pallas as pl
from jax.experimental.pallas import tpu as pltpu


def _cls_softmax_kernel(h_ref, m_ref, inv_len_ref, w_ref, b_ref, o_ref):
    # h_ref:       (Bb, S, H)  bf16 hidden states for this batch tile
    # m_ref:       (Bb, S, 1)  bf16 attention mask (trailing singleton -> lane bcast)
    # inv_len_ref: (Bb, 1)     f32 exact 1/sequence_length
    # w_ref:       (H, CP)     bf16 classifier weight, class dim padded to 128
    # b_ref:       (1, CP)     f32 classifier bias (-1e30 on pad lanes)
    # o_ref:       (Bb, CP)    f32 probabilities (pad lanes ~0)

    # Masked sum over the sequence axis: bf16 VPU multiply, sublane (XLU)
    # reduce accumulated directly into f32 — no bulk f32 copy of hidden.
    prod = h_ref[...] * m_ref[...]                               # (Bb, S, H) bf16
    pooled = jnp.sum(prod, axis=1, dtype=jnp.float32)            # (Bb, H)  f32
    pooled = pooled * inv_len_ref[...]                           # exact mean

    # Classifier head: single bf16 MXU matmul (M = Bb) with f32 accumulation.
    logits = jnp.dot(pooled.astype(jnp.bfloat16), w_ref[...],
                     preferred_element_type=jnp.float32) + b_ref[...]  # (Bb, CP)

    # Numerically stable softmax along dim=-1 (matches torch.softmax(..., -1)).
    # Pad lanes carry bias -1e30 in f32, so exp() underflows to exactly 0 and
    # they do not perturb the normalizer over the real classes.
    z = logits - jnp.max(logits, axis=-1, keepdims=True)
    e = jnp.exp(z)
    o_ref[...] = e / jnp.sum(e, axis=-1, keepdims=True)          # exact division


def classify_probs(hidden, mask_b, inv_len, w_pad, b_pad, *, block_b=8):
    """hidden: [B,S,H] bf16, mask_b: [B,S,1] bf16, inv_len: [B,1] f32,
    w_pad: [H,CP] bf16, b_pad: [1,CP] f32  ->  [B,CP] f32 probabilities."""
    B, S, H = hidden.shape
    CP = w_pad.shape[1]
    bb = block_b if (B % block_b == 0) else B      # batch tile (toy B=2 -> bb=2)
    grid = (B // bb,)

    return pl.pallas_call(
        _cls_softmax_kernel,
        out_shape=jax.ShapeDtypeStruct((B, CP), jnp.float32),
        grid_spec=pltpu.PrefetchScalarGridSpec(
            num_scalar_prefetch=0,
            grid=grid,
            in_specs=[
                pl.BlockSpec((bb, S, H), lambda i: (i, 0, 0)),   # hidden tile
                pl.BlockSpec((bb, S, 1), lambda i: (i, 0, 0)),   # mask tile
                pl.BlockSpec((bb, 1), lambda i: (i, 0)),         # 1/len tile
                pl.BlockSpec((H, CP), lambda i: (0, 0)),         # weight (resident)
                pl.BlockSpec((1, CP), lambda i: (0, 0)),         # bias (resident)
            ],
            out_specs=pl.BlockSpec((bb, CP), lambda i: (i, 0)),
        ),
        compiler_params=pltpu.CompilerParams(
            # One grid axis over batch: pipelines hidden DMA, splits across
            # the two TensorCores on v7x.
            dimension_semantics=("parallel",),
            # Let XLA fuse the embedding-sum / bf16-cast producer of `hidden`
            # into the kernel input instead of materializing it in HBM.
            allow_input_fusion=[True, False, False, False, False],
            # Explicit scoped-VMEM budget with headroom on v7x (64 MiB phys).
            vmem_limit_bytes=48 * 1024 * 1024,
        ),
    )(hidden, mask_b, inv_len, w_pad, b_pad)


def prepare_classifier_params(w, b):
    """Pad classifier weight/bias to a lane-dense (128) class dim once, at init."""
    H, C = w.shape
    CP = ((C + 127) // 128) * 128
    w_pad = jnp.zeros((H, CP), jnp.bfloat16).at[:, :C].set(w.astype(jnp.bfloat16))
    b_pad = jnp.full((1, CP), -1e30, jnp.float32).at[0, :C].set(b.astype(jnp.float32))
    return w_pad, b_pad


def pred_forward(input_ids, token_type_ids, attention_mask, params):
    """Synthetic equivalent of pred.forward: returns probs[0][0] plus full probs."""
    # ---- glue: embedding lookups (gathers, handled by XLA) ----
    tok_emb = params["tok_emb"][input_ids]                        # (B, S, H)
    typ_emb = params["typ_emb"][token_type_ids]                   # (B, S, H)
    pos_emb = params["pos_emb"][None, : input_ids.shape[1], :]    # (1, S, H)
    # bf16 feed (the add/cast producer may fuse into the pallas_call input).
    hidden = (tok_emb + typ_emb + pos_emb).astype(jnp.bfloat16)

    # Mask pre-shaped (B, S, 1) bf16 -> pure lane broadcast inside the kernel.
    mask_b = attention_mask.astype(jnp.bfloat16)[:, :, None]
    # Exact 1/length computed once on the host side of the kernel boundary.
    lengths = jnp.sum(attention_mask.astype(jnp.float32), axis=-1, keepdims=True)
    inv_len = 1.0 / jnp.maximum(lengths, 1.0)                     # (B, 1) f32

    # ---- Pallas hot path: masked-mean pool + classifier + softmax ----
    probs_pad = classify_probs(hidden, mask_b, inv_len,
                               params["cls_w_pad"], params["cls_b_pad"])
    probs = probs_pad[:, : params["num_classes"]]                 # (B, C)
    return probs[0, 0], probs


if __name__ == "__main__":
    key = jax.random.PRNGKey(0)
    k1, k2, k3, k4, k5, k6 = jax.random.split(key, 6)

    # small, module-consistent shapes
    B = 2          # batch of texts
    S = 8          # max_seq_len (small stand-in for 200)
    H = 32         # hidden size
    C = 4          # number of classes
    VOCAB = 64
    NTYPES = 2

    cls_w = jax.random.normal(k4, (H, C), jnp.float32) * 0.1
    cls_b = jnp.zeros((C,), jnp.float32)
    cls_w_pad, cls_b_pad = prepare_classifier_params(cls_w, cls_b)  # once, outside jit

    params = {
        "tok_emb": jax.random.normal(k1, (VOCAB, H), jnp.float32) * 0.02,
        "typ_emb": jax.random.normal(k2, (NTYPES, H), jnp.float32) * 0.02,
        "pos_emb": jax.random.normal(k3, (S, H), jnp.float32) * 0.02,
        "cls_w_pad": cls_w_pad,
        "cls_b_pad": cls_b_pad,
        "num_classes": C,
    }

    # deterministic "tokenized" inputs (what the tokenizer would produce)
    input_ids = jax.random.randint(k5, (B, S), 0, VOCAB, dtype=jnp.int32)
    token_type_ids = jnp.zeros((B, S), jnp.int32)
    # pad out the tail of each sequence like padding='max_length'
    lengths = jnp.array([6, 5], jnp.int32)
    attention_mask = (jnp.arange(S)[None, :] < lengths[:, None]).astype(jnp.int32)
    input_ids = input_ids * attention_mask  # pad token id 0

    fwd = jax.jit(lambda a, b, c: pred_forward(a, b, c, params))
    p00, probs = fwd(input_ids, token_type_ids, attention_mask)
    jax.block_until_ready(probs)

    # ---- pure-JAX reference (f32) for correctness ----
    hid_ref = (params["tok_emb"][input_ids] + params["typ_emb"][token_type_ids]
               + params["pos_emb"][None, :S, :])
    m_f = attention_mask.astype(jnp.float32)
    pooled_ref = jnp.sum(hid_ref * m_f[:, :, None], axis=1) / jnp.maximum(
        jnp.sum(m_f, axis=-1, keepdims=True), 1.0)
    logits_ref = pooled_ref @ cls_w + cls_b
    probs_ref = jax.nn.softmax(logits_ref, axis=-1)

    assert jnp.allclose(jnp.sum(probs, axis=-1), 1.0, atol=1e-3)
    assert jnp.allclose(probs, probs_ref, atol=2e-2)   # bf16 feed tolerance budget
    assert bool(jnp.all(probs >= 0.0)) and bool(jnp.all(probs <= 1.0 + 1e-3))
    print("KERNEL_OK")
</pallas_src>

<mosaic_0001>
module attributes {stable_mosaic.version = 11 : i64} {
  func.func @_cls_softmax_kernel(%arg0: i32, %arg1: memref<2x8x32xbf16, #tpu.memory_space<vmem>>, %arg2: memref<2x8x1xbf16, #tpu.memory_space<vmem>>, %arg3: memref<2x1xf32, #tpu.memory_space<vmem>>, %arg4: memref<32x128xbf16, #tpu.memory_space<vmem>>, %arg5: memref<1x128xf32, #tpu.memory_space<vmem>>, %arg6: memref<2x128xf32, #tpu.memory_space<vmem>>) attributes {dimension_semantics = [#tpu.dimension_semantics<parallel>], iteration_bounds = array<i64: 1>, scalar_prefetch = 0 : i64, scratch_operands = 0 : i64, tpu.core_type = #tpu.core_type<tc>, window_params = [{transform_indices = @transform_0, window_bounds = array<i64: 2, 8, 32>}, {transform_indices = @transform_1, window_bounds = array<i64: 2, 8, 1>}, {transform_indices = @transform_2, window_bounds = array<i64: 2, 1>}, {pipeline_mode = #tpu.pipeline_mode<synchronous>, transform_indices = @transform_3, window_bounds = array<i64: 32, 128>}, {pipeline_mode = #tpu.pipeline_mode<synchronous>, transform_indices = @transform_4, window_bounds = array<i64: 1, 128>}, {transform_indices = @transform_5, window_bounds = array<i64: 2, 128>}]} {
    %c0 = arith.constant 0 : index
    %c0_0 = arith.constant 0 : index
    %c0_1 = arith.constant 0 : index
    %0 = vector.load %arg1[%c0, %c0_0, %c0_1] : memref<2x8x32xbf16, #tpu.memory_space<vmem>>, vector<2x8x32xbf16>
    %c0_2 = arith.constant 0 : index
    %c0_3 = arith.constant 0 : index
    %c0_4 = arith.constant 0 : index
    %1 = vector.load %arg2[%c0_2, %c0_3, %c0_4] : memref<2x8x1xbf16, #tpu.memory_space<vmem>>, vector<2x8x1xbf16>
    %2 = vector.broadcast %1 : vector<2x8x1xbf16> to vector<2x8x32xbf16>
    %3 = arith.mulf %0, %2 : vector<2x8x32xbf16>
    %4 = arith.extf %3 : vector<2x8x32xbf16> to vector<2x8x32xf32>
    %cst = arith.constant dense<0.000000e+00> : vector<2x32xf32>
    %5 = vector.multi_reduction <add>, %4, %cst [1] : vector<2x8x32xf32> to vector<2x32xf32>
    %c0_5 = arith.constant 0 : index
    %c0_6 = arith.constant 0 : index
    %6 = vector.load %arg3[%c0_5, %c0_6] : memref<2x1xf32, #tpu.memory_space<vmem>>, vector<2x1xf32>
    %7 = vector.broadcast %6 : vector<2x1xf32> to vector<2x32xf32>
    %8 = arith.mulf %5, %7 : vector<2x32xf32>
    %9 = arith.truncf %8 : vector<2x32xf32> to vector<2x32xbf16>
    %c0_7 = arith.constant 0 : index
    %c0_8 = arith.constant 0 : index
    %10 = vector.load %arg4[%c0_7, %c0_8] : memref<32x128xbf16, #tpu.memory_space<vmem>>, vector<32x128xbf16>
    %cst_9 = arith.constant dense<0.000000e+00> : vector<2x128xf32>
    %11 = tpu.matmul %9, %10, %cst_9 {dimension_numbers = #tpu.dot_dimension_numbers<[1], [0], [0], [1], [0, 0, 1, 1], [], []>} : vector<2x32xbf16>, vector<32x128xbf16>, vector<2x128xf32> -> vector<2x128xf32>
    %c0_10 = arith.constant 0 : index
    %c0_11 = arith.constant 0 : index
    %12 = vector.load %arg5[%c0_10, %c0_11] : memref<1x128xf32, #tpu.memory_space<vmem>>, vector<1x128xf32>
    %13 = vector.broadcast %12 : vector<1x128xf32> to vector<2x128xf32>
    %14 = arith.addf %11, %13 : vector<2x128xf32>
    %cst_12 = arith.constant dense<0xFF800000> : vector<2xf32>
    %15 = vector.multi_reduction <maximumf>, %14, %cst_12 [1] : vector<2x128xf32> to vector<2xf32>
    %16 = vector.shape_cast %15 : vector<2xf32> to vector<2x1xf32>
    %17 = vector.broadcast %16 : vector<2x1xf32> to vector<2x128xf32>
    %18 = arith.subf %14, %17 : vector<2x128xf32>
    %19 = math.exp %18 : vector<2x128xf32>
    %cst_13 = arith.constant dense<0.000000e+00> : vector<2xf32>
    %20 = vector.multi_reduction <add>, %19, %cst_13 [1] : vector<2x128xf32> to vector<2xf32>
    %21 = vector.shape_cast %20 : vector<2xf32> to vector<2x1xf32>
    %22 = vector.broadcast %21 : vector<2x1xf32> to vector<2x128xf32>
    %23 = arith.divf %19, %22 : vector<2x128xf32>
    %c0_14 = arith.constant 0 : index
    %c0_15 = arith.constant 0 : index
    %24 = vector.load %arg6[%c0_14, %c0_15] : memref<2x128xf32, #tpu.memory_space<vmem>>, vector<2x128xf32>
    tpu.vector_store %arg6[%c0_14, %c0_15], %23 {strides = array<i32>} : memref<2x128xf32, #tpu.memory_space<vmem>>, vector<2x128xf32>,
    return
  }
  func.func @transform_0(%arg0: i32) -> (i32, i32, i32) {
    %c0_i32 = arith.constant 0 : i32
    %c0_i32_0 = arith.constant 0 : i32
    %c0_i32_1 = arith.constant 0 : i32
    return %arg0, %c0_i32, %c0_i32_0 : i32, i32, i32
  }
  func.func @transform_1(%arg0: i32) -> (i32, i32, i32) {
    %c0_i32 = arith.constant 0 : i32
    %c0_i32_0 = arith.constant 0 : i32
    %c0_i32_1 = arith.constant 0 : i32
    return %arg0, %c0_i32, %c0_i32_0 : i32, i32, i32
  }
  func.func @transform_2(%arg0: i32) -> (i32, i32) {
    %c0_i32 = arith.constant 0 : i32
    %c0_i32_0 = arith.constant 0 : i32
    return %arg0, %c0_i32 : i32, i32
  }
  func.func @transform_3(%arg0: i32) -> (i32, i32) {
    %c0_i32 = arith.constant 0 : i32
    %c0_i32_0 = arith.constant 0 : i32
    %c0_i32_1 = arith.constant 0 : i32
    return %c0_i32, %c0_i32_0 : i32, i32
  }
  func.func @transform_4(%arg0: i32) -> (i32, i32) {
    %c0_i32 = arith.constant 0 : i32
    %c0_i32_0 = arith.constant 0 : i32
    %c0_i32_1 = arith.constant 0 : i32
    return %c0_i32, %c0_i32_0 : i32, i32
  }
  func.func @transform_5(%arg0: i32) -> (i32, i32) {
    %c0_i32 = arith.constant 0 : i32
    %c0_i32_0 = arith.constant 0 : i32
    return %arg0, %c0_i32 : i32, i32
  }
}

</mosaic_0001>

<llo_original>
// kernel: _lambda_.2
$region0: #{_lambda_.2}
  #allocation0 [shape = 'u32[]', space=smem, size = 0x4, offset = 0x4, fixed_abs, tag = 'smem constant byte address 0x4 - core index']
  #allocation1 [shape = 'u32[144,128]{1,0:T(1,128)}', space=vmem, size = 0x12000, scoped, tag = 'internal scratch']
  %s0 = inlined_call_operand.vmem [shape: bf16[2,8,1], index: 0, kind: input, shape index: {}]
  %s1 = inlined_call_operand.vmem [shape: f32[2,1], index: 1, kind: input, shape index: {}]
  %s2 = inlined_call_operand.vmem [shape: bf16[32,128], index: 2, kind: input, shape index: {}]
  %s3 = inlined_call_operand.vmem [shape: f32[1,128], index: 3, kind: input, shape index: {}]
  %s4 = inlined_call_operand.vmem [shape: f32[16,32], index: 4, kind: input, shape index: {}]
  %s5 = inlined_call_operand.vmem [shape: f32[16,32], index: 5, kind: input, shape index: {}]
  %s6 = inlined_call_operand.vmem [shape: f32[8,32], index: 6, kind: input, shape index: {}]
  %s7 = inlined_call_operand.vmem [shape: f32[2,128], index: 7, kind: output, shape index: {}]
  %s8 = sld [smem:[#allocation0]]
  $region38: #{_lambda_.2} parent=0
    _
  %s10 = ssub.s32 1, %s8
  %s11 = scalar_select 0, %s10, %s8
  $region1: #{_lambda_.2} parent=0
    #allocation2 [shape = 'u8[4096]{0}', space=vmem, size = 0x1000, dematerialized = true, scoped, tag = 'FusionAdapter Buffer %fusion.2 = bf16[2,8,32]{2,1,0:T(8,128)(2,1)} fusion(%param_4.2, %param_5.1, %param_6.1), kind=kLoop, calls=%fused_computation.3.clone.clone, metadata={op_name="jit(<lambda>)/convert_element_type" stack_frame_id=12}']
    // Predicated region
    $region2: #{_lambda_.2} parent=1 // pred_check
      _
    $region3: #{_lambda_.2} parent=1 // pred_check_branch
      %13 = sbr.rel (0) target = $region5
    $region4: #{_lambda_.2} parent=1 // pred_region
      _
    $region5: #{_lambda_.2} parent=1 // pred_fallthru
      _
    // Predicated region
    $region6: #{_lambda_.2} parent=1 // pred_check
      _
    $region7: #{_lambda_.2} parent=1 // pred_check_branch
      %15 = sbr.rel (0) target = $region9
    $region8: #{_lambda_.2} parent=1 // pred_region
      _
    $region9: #{_lambda_.2} parent=1 // pred_fallthru
      _
    // Predicated region
    $region10: #{_lambda_.2} parent=1 // pred_check
      _
    $region11: #{_lambda_.2} parent=1 // pred_check_branch
      %17 = sbr.rel (0) target = $region13
    $region12: #{_lambda_.2} parent=1 // pred_region
      _
    $region13: #{_lambda_.2} parent=1 // pred_fallthru
      _
    // Predicated region
    $region14: #{_lambda_.2} parent=1 // pred_check
      _
    $region15: #{_lambda_.2} parent=1 // pred_check_branch
      %19 = sbr.rel (0) target = $region17
    $region16: #{_lambda_.2} parent=1 // pred_region
      _
    $region17: #{_lambda_.2} parent=1 // pred_fallthru
      _
    // Predicated region
    $region18: #{_lambda_.2} parent=1 // pred_check
      _
    $region19: #{_lambda_.2} parent=1 // pred_check_branch
      %21 = sbr.rel (0) target = $region21
    $region20: #{_lambda_.2} parent=1 // pred_region
      _
    $region21: #{_lambda_.2} parent=1 // pred_fallthru
      _
    // Predicated region
    $region22: #{_lambda_.2} parent=1 // pred_check
      _
    $region23: #{_lambda_.2} parent=1 // pred_check_branch
      %23 = sbr.rel (0) target = $region25
    $region24: #{_lambda_.2} parent=1 // pred_region
      _
    $region25: #{_lambda_.2} parent=1 // pred_fallthru
      _
    // Predicated region
    $region26: #{_lambda_.2} parent=1 // pred_check
      _
    $region27: #{_lambda_.2} parent=1 // pred_check_branch
      %25 = sbr.rel (0) target = $region29
    $region28: #{_lambda_.2} parent=1 // pred_region
      _
    $region29: #{_lambda_.2} parent=1 // pred_fallthru
      _
    %v26 = vld [vmem:[%s4] sm:$0xff]
    %v27 = vld [vmem:[%s5] sm:$0xff]
    %v28 = vld [vmem:[%s6] sm:$0xff]
    %29 = xla_tuple %v26, %v27
    %30 = xla_tuple %29
    %v31 = vadd.f32 %v26, %v27
    %32 = xla_tuple %v31
    %33 = xla_tuple %v31, %v28
    %34 = xla_tuple %33
    %v35 = vadd.f32 %v31, %v28
    %36 = xla_tuple %v35
    %37 = xla_tuple %v35
    %38 = xla_tuple %37
    %39 = xla_tuple %v35
    %v40 = vpack.c.bf16 0.0, %v35
    %42 = vst [vmem:[#allocation2] sm:$0xf] %v40
    %s43 = scalar_lea.vmem %s4, 8
    %v44 = vld [vmem:[%s43] sm:$0xff]
    %s45 = scalar_lea.vmem %s5, 8
    %v46 = vld [vmem:[%s45] sm:$0xff]
    %47 = xla_tuple %v44, %v46
    %48 = xla_tuple %47
    %v49 = vadd.f32 %v44, %v46
    %50 = xla_tuple %v49
    %51 = xla_tuple %v49, %v28
    %52 = xla_tuple %51
    %v53 = vadd.f32 %v49, %v28
    %54 = xla_tuple %v53
    %55 = xla_tuple %v53
    %56 = xla_tuple %55
    %57 = xla_tuple %v53
    %s58 = scalar_lea.vmem [#allocation2], 4
    %v59 = vpack.c.bf16 0.0, %v53
    %61 = vst [vmem:[%s58] sm:$0xf] %v59
    %v63 = vld [vmem:[#allocation2] sm:$0xf]
    %v64 = vld [vmem:[#allocation2 + $0x4] sm:$0xf]
    %v65 = vld [vmem:[%s0] sm:$0xf]
    %v66 = vld [vmem:[%s0 + $0x4] sm:$0xf]
    %68 = vset.pattern.permute.xlu0 0
    %69 = vperm.xlu0 %68, %v65
    %v70 = vpop.permute.xlu0 %69
    %v73 = vunpack.c.l.s4 839922192
    %v74 = vunpack.c.0.s8 %v73
    %v75 = vlaneseq
    %v76 = vshrl.u32 %v75, 7
    %v77 = vsub.s32 %v74, %v76
    %v78 = vrot.slane %v70, %v77
    %80 = vset.pattern.permute.xlu0 0
    %81 = vperm.xlu0 %80, %v66
    %v82 = vpop.permute.xlu0 %81
    %v85 = vunpack.c.l.s4 839922192
    %v86 = vunpack.c.0.s8 %v85
    %v87 = vlaneseq
    %v88 = vshrl.u32 %v87, 7
    %v89 = vsub.s32 %v86, %v88
    %v90 = vrot.slane %v82, %v89
    %v91 = vmul.bf16 %v63, %v78
    %v92 = vmul.bf16 %v64, %v90
    %v93 = vunpack.c.l.bf16 %v91
    %v94 = vunpack.c.l.bf16 %v92
    %vm95 = vcmask 261120
    %v96 = vsel %vm95, %v93, 0.0
    %v97 = vrot.slane %v96, 4
    %v98 = vadd.f32 %v96, %v97
    %v99 = vrot.slane %v98, 2
    %v100 = vadd.f32 %v98, %v99
    %v101 = vrot.slane %v100, 1
    %v102 = vadd.f32 %v100, %v101
    %v103 = vsel %vm95, %v94, 0.0
    %v104 = vrot.slane %v103, 4
    %v105 = vadd.f32 %v103, %v104
    %v106 = vrot.slane %v105, 2
    %v107 = vadd.f32 %v105, %v106
    %v108 = vrot.slane %v107, 1
    %v109 = vadd.f32 %v107, %v108
    %v110 = vld [vmem:[%s1] sm:$0x3]
    %112 = vset.pattern.permute.xlu0 0
    %113 = vperm.xlu0 %112, %v110
    %v114 = vpop.permute.xlu0 %113
    %v115 = vrot.slane %v114, 1
    %v118 = vmul.f32 %v102, %v114
    %v119 = vmul.f32 %v109, %v115
    %v120 = vpack.c.bf16 %v118, %v118
    %v121 = vpack.c.bf16 %v119, %v119
    %v122 = vld [vmem:[%s2] sm:$0xff]
    %v123 = vld [vmem:[%s2 + $0x8] sm:$0xff]
    %v124 = vld [vmem:[%s3] sm:$0x1]
    %v126 = vlaneseq
    %v127 = vshrl.u32 %v126, 7
    %v128 = vsub.s32 0, %v127
    %v129 = vrot.slane %v124, %v128
    %v133 = vunpack.c.l.b16 %v120
    %v134 = vunpack.c.l.b16 %v121
    %v135 = vrot.slane %v134, 7
    %vm136 = vcmask 1041409
    %v137 = vsel %vm136, %v135, %v133
    %v138 = vpack.c.b16 %v137, %v137
    %v140 = vsel %vm95, %v138, 0
    %142 = vmatprep.subr.bf16.mxu0 0
    %143 = vmatpush1.bf16.msra.mxu0 %v122
    %144 = vmatprep.subr.bf16.mxu0 0
    %145 = vmatpush1.bf16.msra.mxu0 %v123
    %146 = vmatprep.subr.bf16.mxu0 0
    %147 = vmatpush1.bf16.msra.mxu0 0
    %148 = vmatprep.subr.bf16.mxu0 0
    %149 = vmatpush1.bf16.msra.mxu0 0
    %150 = vmatprep.subr.bf16.mxu0 0
    %151 = vmatpush1.bf16.msra.mxu0 0
    %152 = vmatprep.subr.bf16.mxu0 0
    %153 = vmatpush1.bf16.msra.mxu0 0
    %154 = vmatprep.subr.bf16.mxu0 0
    %155 = vmatpush1.bf16.msra.mxu0 0
    %156 = vmatprep.subr.bf16.mxu0 0
    %157 = vmatpush1.bf16.msra.mxu0 0
    %158 = vmatprep.subr.bf16.mxu0 0
    %159 = vmatpush1.bf16.msra.mxu0 0
    %160 = vmatprep.subr.bf16.mxu0 0
    %161 = vmatpush1.bf16.msra.mxu0 0
    %162 = vmatprep.subr.bf16.mxu0 0
    %163 = vmatpush1.bf16.msra.mxu0 0
    %164 = vmatprep.subr.bf16.mxu0 0
    %165 = vmatpush1.bf16.msra.mxu0 0
    %166 = vmatprep.subr.bf16.mxu0 0
    %167 = vmatpush1.bf16.msra.mxu0 0
    %168 = vmatprep.subr.bf16.mxu0 0
    %169 = vmatpush1.bf16.msra.mxu0 0
    %170 = vmatprep.subr.bf16.mxu0 0
    %171 = vmatpush1.bf16.msra.mxu0 0
    %172 = vmatprep.subr.bf16.mxu0 0
    %173 = vmatpush1.bf16.msra.mxu0 0
    %174 = vmatprep.mubr.bf16.mxu0 0
    %175 = vmatmul.mubr.bf16.gmra.mrb[0].mxu0 %v140
    %v176 = vpop.f32.mrb[0].mxu0
    %v177 = vadd.f32 %v129, %v176
    %v178 = vpop.f32.mrb[0].mxu0
    %v179 = vpop.f32.mrb[0].mxu0
    %v180 = vpop.f32.mrb[0].mxu0
    %181 = vdwg.mxu0
    %vm182 = vcmask 1041408
    %v183 = vsel %vm182, %v177, -inf
    %184 = vmax.xlane.f32.xlu0 %v183
    %v185 = vpop.xlane.xlu0 %184
    %v186 = vsub.f32 %v177, %v185
    %v187 = vmul.f32 %v186, 1.442695
    %v188 = vpow.pop %v187
    %v189 = vsel %vm182, %v188, 0.0
    %190 = vadd.xlane.f32.xlu0 %v189
    %v191 = vpop.xlane.xlu0 %190
    %v192 = vrcp.pop %v191
    %v193 = vmul.f32 %v188, %v192
    %194 = vst [vmem:[%s7] sm:$0x3] %v193
    // Predicated region
    $region30: #{_lambda_.2} parent=1 // pred_check
      _
    $region31: #{_lambda_.2} parent=1 // pred_check_branch
      %196 = sbr.rel (0) target = $region33
    $region32: #{_lambda_.2} parent=1 // pred_region
      _
    $region33: #{_lambda_.2} parent=1 // pred_fallthru
      _
    // Predicated region
    $region34: #{_lambda_.2} parent=1 // pred_check
      _
    $region35: #{_lambda_.2} parent=1 // pred_check_branch
      %198 = sbr.rel (0) target = $region37
    $region36: #{_lambda_.2} parent=1 // pred_region
      _
    $region37: #{_lambda_.2} parent=1 // pred_fallthru
      _

</llo_original>
